<compile_context>
chip_gen: v7x
topology: tpu7x:2x2x1
jax: 0.10.0
libtpu: 0.0.40
codegen_flags: <defaults>
</compile_context>

<pallas_src>
import jax
import jax.numpy as jnp
from jax.experimental import pallas as pl
from jax.experimental.pallas import tpu as pltpu


def _round_up(n, m):
    return ((n + m - 1) // m) * m


def mlp_fused_kernel(x_ref, w1_ref, w2_ref, wh_ref, b_ref, out_ref):
    """x:[TB,IN] bf16, w*: bf16 (lane-padded), b:[8,BW] f32.

    b rows: 0 = fc1 bias, 1 = fc2 bias, 2 = fused head bias (policy|value|0),
            3 = policy-column mask (1.0 on policy columns, 0.0 elsewhere).
    """
    h_dim = w1_ref.shape[1]
    hd_dim = wh_ref.shape[1]

    x = x_ref[...]  # already bf16

    # fc1 + relu  (bf16 MXU, f32 accumulate, f32 elementwise)
    h1 = jnp.dot(x, w1_ref[...], preferred_element_type=jnp.float32)
    h1 = jnp.maximum(h1 + b_ref[0:1, 0:h_dim], 0.0)

    # fc2 + relu
    h2 = jnp.dot(h1.astype(jnp.bfloat16), w2_ref[...],
                 preferred_element_type=jnp.float32)
    h2 = jnp.maximum(h2 + b_ref[1:2, 0:h_dim], 0.0)

    # fused policy|value head: one matmul, one lane-dense bf16 store
    heads = jnp.dot(h2.astype(jnp.bfloat16), wh_ref[...],
                    preferred_element_type=jnp.float32)
    heads = heads + b_ref[2:3, 0:hd_dim]

    # blend tanh(heads) on policy columns, identity on the value column,
    # using the precomputed 0/1 mask (no per-tile iota / int compare).
    mask = b_ref[3:4, 0:hd_dim]
    out = heads + mask * (jnp.tanh(heads) - heads)
    out_ref[...] = out.astype(out_ref.dtype)


def init_raw_params(key, input_dim, hidden_dim, num_outputs):
    """PyTorch-style nn.Linear init at the module's true shapes (f32)."""
    ks = jax.random.split(key, 8)

    def linear(kw, kb, fan_in, fan_out):
        bound = 1.0 / jnp.sqrt(fan_in)
        w = jax.random.uniform(kw, (fan_in, fan_out), jnp.float32, -bound, bound)
        b = jax.random.uniform(kb, (fan_out,), jnp.float32, -bound, bound)
        return w, b

    w1, b1 = linear(ks[0], ks[1], input_dim, hidden_dim)
    w2, b2 = linear(ks[2], ks[3], hidden_dim, hidden_dim)
    wp, bp = linear(ks[4], ks[5], hidden_dim, num_outputs)
    wv, bv = linear(ks[6], ks[7], hidden_dim, 1)
    return {"w1": w1, "b1": b1, "w2": w2, "b2": b2,
            "wp": wp, "bp": bp, "wv": wv, "bv": bv}


def pack_params(raw, input_dim, hidden_dim, num_outputs):
    """One-time padding/packing into the kernel layout (done at init, not per call)."""
    in_pad = _round_up(input_dim, 8)
    h_pad = _round_up(hidden_dim, 128)
    hd_pad = _round_up(num_outputs + 1, 128)   # policy cols + value col, lane-padded
    bw = max(h_pad, hd_pad)

    w1 = jnp.zeros((in_pad, h_pad), jnp.float32).at[:input_dim, :hidden_dim].set(raw["w1"])
    w2 = jnp.zeros((h_pad, h_pad), jnp.float32).at[:hidden_dim, :hidden_dim].set(raw["w2"])
    wh = jnp.zeros((h_pad, hd_pad), jnp.float32)
    wh = wh.at[:hidden_dim, :num_outputs].set(raw["wp"])
    wh = wh.at[:hidden_dim, num_outputs].set(raw["wv"][:, 0])

    b = jnp.zeros((8, bw), jnp.float32)
    b = b.at[0, :hidden_dim].set(raw["b1"])
    b = b.at[1, :hidden_dim].set(raw["b2"])
    b = b.at[2, :num_outputs].set(raw["bp"])
    b = b.at[2, num_outputs].set(raw["bv"][0])
    b = b.at[3, :num_outputs].set(1.0)         # policy-column mask

    return {"w1": w1.astype(jnp.bfloat16),
            "w2": w2.astype(jnp.bfloat16),
            "wh": wh.astype(jnp.bfloat16),
            "b": b,
            "num_outputs": num_outputs}


def _choose_batch_tile(n_rows):
    """Batch tile: 8-aligned, <= 512 rows, and >= 2 grid steps when there is
    enough work so both v7x TensorCores get a share of the parallel axis."""
    n = _round_up(max(n_rows, 8), 8)
    if n <= 16:
        return n                                   # tiny rollout batch: 1 step
    return min(512, _round_up((n + 1) // 2, 8))    # >= 2 steps up to n=1024


def custom_torch_model_forward(x, packed, num_outputs):
    """Returns (policy [B, num_outputs], value [B]) matching the PyTorch module."""
    B, in_dim = x.shape
    in_pad, h_pad = packed["w1"].shape
    hd_pad = packed["wh"].shape[1]

    tb = _choose_batch_tile(B)
    b_pad = _round_up(max(B, tb), tb)

    # bf16 input: halves the x HBM read; padding (if any) fuses with the cast.
    xb = x.astype(jnp.bfloat16)
    if (b_pad, in_pad) != xb.shape:
        xb = jnp.pad(xb, ((0, b_pad - B), (0, in_pad - in_dim)))

    flops = 2 * b_pad * (in_pad * h_pad + h_pad * h_pad + h_pad * hd_pad)
    transcendentals = b_pad * hd_pad
    bytes_accessed = (b_pad * in_pad * 2
                      + (in_pad * h_pad + h_pad * h_pad + h_pad * hd_pad) * 2
                      + packed["b"].size * 4
                      + b_pad * hd_pad * 2)

    out = pl.pallas_call(
        mlp_fused_kernel,
        out_shape=jax.ShapeDtypeStruct((b_pad, hd_pad), jnp.bfloat16),
        grid_spec=pltpu.PrefetchScalarGridSpec(
            num_scalar_prefetch=0,
            grid=(b_pad // tb,),
            in_specs=[
                pl.BlockSpec((tb, in_pad), lambda i: (i, 0)),            # x tile
                pl.BlockSpec((in_pad, h_pad), lambda i: (0, 0),
                             pipeline_mode=pl.Buffered(1)),              # w1 (resident)
                pl.BlockSpec((h_pad, h_pad), lambda i: (0, 0),
                             pipeline_mode=pl.Buffered(1)),              # w2 (resident)
                pl.BlockSpec((h_pad, hd_pad), lambda i: (0, 0),
                             pipeline_mode=pl.Buffered(1)),              # wh (resident)
                pl.BlockSpec(packed["b"].shape, lambda i: (0, 0),
                             pipeline_mode=pl.Buffered(1)),              # biases + mask
            ],
            out_specs=pl.BlockSpec((tb, hd_pad), lambda i: (i, 0)),
        ),
        compiler_params=pltpu.CompilerParams(
            dimension_semantics=("parallel",)),
        cost_estimate=pl.CostEstimate(flops=flops,
                                      transcendentals=transcendentals,
                                      bytes_accessed=bytes_accessed),
    )(xb, packed["w1"], packed["w2"], packed["wh"], packed["b"])

    # Value is upcast from the bf16 slab; if the RL value loss turns out to be
    # bf16-sensitive, emit the value column as a separate small f32 output.
    policy = out[:B, :num_outputs].astype(jnp.float32)
    value = out[:B, num_outputs].astype(jnp.float32)
    return policy, value


def custom_torch_model_rollout(xs, packed, num_outputs):
    """xs: [T, B, obs]. One pallas_call for the whole rollout: the timestep
    loop is folded into the kernel's batch grid axis, so weights are DMA'd and
    kept VMEM-resident once per rollout instead of once per step."""
    T, B, in_dim = xs.shape
    policy, value = custom_torch_model_forward(
        xs.reshape(T * B, in_dim), packed, num_outputs)
    return policy.reshape(T, B, num_outputs), value.reshape(T, B)


if __name__ == "__main__":
    key = jax.random.PRNGKey(0)
    k_params, k_x, k_xr = jax.random.split(key, 3)

    batch = 8
    input_dim = 16      # obs_space.shape[0]
    hidden_dim = 56
    num_outputs = 4

    raw = init_raw_params(k_params, input_dim, hidden_dim, num_outputs)
    packed = pack_params(raw, input_dim, hidden_dim, num_outputs)
    x = jax.random.normal(k_x, (batch, input_dim), jnp.float32)

    # --- single step (per-call rollout style) ---
    policy, value = custom_torch_model_forward(x, packed, num_outputs)
    jax.block_until_ready((policy, value))
    assert policy.shape == (batch, num_outputs)
    assert value.shape == (batch,)

    # plain-JAX f32 reference of the original module
    def ref_forward(xf):
        h1 = jnp.maximum(xf @ raw["w1"] + raw["b1"], 0.0)
        h2 = jnp.maximum(h1 @ raw["w2"] + raw["b2"], 0.0)
        pol = jnp.tanh(h2 @ raw["wp"] + raw["bp"])
        val = (h2 @ raw["wv"] + raw["bv"]).squeeze(-1)
        return pol, val

    pol_ref, val_ref = ref_forward(x)
    assert jnp.allclose(policy, pol_ref, atol=1e-1), float(
        jnp.max(jnp.abs(policy - pol_ref)))
    assert jnp.allclose(value, val_ref, atol=1e-1), float(
        jnp.max(jnp.abs(value - val_ref)))

    # tighter check against a bf16-MXU / f32-accum / bf16-output emulation
    bf = jnp.bfloat16
    h1b = jnp.maximum(jnp.dot(x.astype(bf), raw["w1"].astype(bf),
                              preferred_element_type=jnp.float32) + raw["b1"], 0.0)
    h2b = jnp.maximum(jnp.dot(h1b.astype(bf), raw["w2"].astype(bf),
                              preferred_element_type=jnp.float32) + raw["b2"], 0.0)
    pol_bf = jnp.tanh(jnp.dot(h2b.astype(bf), raw["wp"].astype(bf),
                              preferred_element_type=jnp.float32) + raw["bp"]
                      ).astype(bf).astype(jnp.float32)
    val_bf = (jnp.dot(h2b.astype(bf), raw["wv"].astype(bf),
                      preferred_element_type=jnp.float32) + raw["bv"]
              ).squeeze(-1).astype(bf).astype(jnp.float32)
    assert jnp.allclose(policy, pol_bf, atol=2e-2)
    assert jnp.allclose(value, val_bf, atol=2e-2)

    # --- fused rollout: T timesteps in ONE pallas_call (weights resident) ---
    T = 4
    xs = jax.random.normal(k_xr, (T, batch, input_dim), jnp.float32)
    pol_r, val_r = custom_torch_model_rollout(xs, packed, num_outputs)
    jax.block_until_ready((pol_r, val_r))
    assert pol_r.shape == (T, batch, num_outputs)
    assert val_r.shape == (T, batch)

    pol_rr, val_rr = ref_forward(xs.reshape(T * batch, input_dim))
    assert jnp.allclose(pol_r.reshape(T * batch, num_outputs), pol_rr, atol=1e-1)
    assert jnp.allclose(val_r.reshape(T * batch), val_rr, atol=1e-1)

    print("KERNEL_OK")
</pallas_src>

<mosaic_0001>
module attributes {stable_mosaic.version = 11 : i64} {
  func.func @mlp_fused_kernel(%arg0: i32, %arg1: memref<8x16xbf16, #tpu.memory_space<vmem>>, %arg2: memref<16x128xbf16, #tpu.memory_space<vmem>>, %arg3: memref<128x128xbf16, #tpu.memory_space<vmem>>, %arg4: memref<128x128xbf16, #tpu.memory_space<vmem>>, %arg5: memref<8x128xf32, #tpu.memory_space<vmem>>, %arg6: memref<8x128xbf16, #tpu.memory_space<vmem>>) attributes {dimension_semantics = [#tpu.dimension_semantics<parallel>], iteration_bounds = array<i64: 1>, scalar_prefetch = 0 : i64, scratch_operands = 0 : i64, tpu.core_type = #tpu.core_type<tc>, window_params = [{transform_indices = @transform_0, window_bounds = array<i64: 8, 16>}, {pipeline_mode = #tpu.pipeline_mode<synchronous>, transform_indices = @transform_1, window_bounds = array<i64: 16, 128>}, {pipeline_mode = #tpu.pipeline_mode<synchronous>, transform_indices = @transform_2, window_bounds = array<i64: 128, 128>}, {pipeline_mode = #tpu.pipeline_mode<synchronous>, transform_indices = @transform_3, window_bounds = array<i64: 128, 128>}, {pipeline_mode = #tpu.pipeline_mode<synchronous>, transform_indices = @transform_4, window_bounds = array<i64: 8, 128>}, {transform_indices = @transform_5, window_bounds = array<i64: 8, 128>}]} {
    %c0 = arith.constant 0 : index
    %c0_0 = arith.constant 0 : index
    %0 = vector.load %arg1[%c0, %c0_0] : memref<8x16xbf16, #tpu.memory_space<vmem>>, vector<8x16xbf16>
    %c0_1 = arith.constant 0 : index
    %c0_2 = arith.constant 0 : index
    %1 = vector.load %arg2[%c0_1, %c0_2] : memref<16x128xbf16, #tpu.memory_space<vmem>>, vector<16x128xbf16>
    %cst = arith.constant dense<0.000000e+00> : vector<8x128xf32>
    %2 = tpu.matmul %0, %1, %cst {dimension_numbers = #tpu.dot_dimension_numbers<[1], [0], [0], [1], [0, 0, 1, 1], [], []>} : vector<8x16xbf16>, vector<16x128xbf16>, vector<8x128xf32> -> vector<8x128xf32>
    %c0_3 = arith.constant 0 : index
    %c0_4 = arith.constant 0 : index
    %3 = vector.load %arg5[%c0_3, %c0_4] : memref<8x128xf32, #tpu.memory_space<vmem>>, vector<1x128xf32>
    %4 = vector.broadcast %3 : vector<1x128xf32> to vector<8x128xf32>
    %5 = arith.addf %2, %4 : vector<8x128xf32>
    %cst_5 = arith.constant 0.000000e+00 : f32
    %6 = vector.broadcast %cst_5 : f32 to vector<8x128xf32>
    %7 = arith.maximumf %5, %6 : vector<8x128xf32>
    %8 = arith.truncf %7 : vector<8x128xf32> to vector<8x128xbf16>
    %c0_6 = arith.constant 0 : index
    %c0_7 = arith.constant 0 : index
    %9 = vector.load %arg3[%c0_6, %c0_7] : memref<128x128xbf16, #tpu.memory_space<vmem>>, vector<128x128xbf16>
    %cst_8 = arith.constant dense<0.000000e+00> : vector<8x128xf32>
    %10 = tpu.matmul %8, %9, %cst_8 {dimension_numbers = #tpu.dot_dimension_numbers<[1], [0], [0], [1], [0, 0, 1, 1], [], []>} : vector<8x128xbf16>, vector<128x128xbf16>, vector<8x128xf32> -> vector<8x128xf32>
    %c1 = arith.constant 1 : index
    %c0_9 = arith.constant 0 : index
    %11 = vector.load %arg5[%c1, %c0_9] : memref<8x128xf32, #tpu.memory_space<vmem>>, vector<1x128xf32>
    %12 = vector.broadcast %11 : vector<1x128xf32> to vector<8x128xf32>
    %13 = arith.addf %10, %12 : vector<8x128xf32>
    %cst_10 = arith.constant 0.000000e+00 : f32
    %14 = vector.broadcast %cst_10 : f32 to vector<8x128xf32>
    %15 = arith.maximumf %13, %14 : vector<8x128xf32>
    %16 = arith.truncf %15 : vector<8x128xf32> to vector<8x128xbf16>
    %c0_11 = arith.constant 0 : index
    %c0_12 = arith.constant 0 : index
    %17 = vector.load %arg4[%c0_11, %c0_12] : memref<128x128xbf16, #tpu.memory_space<vmem>>, vector<128x128xbf16>
    %cst_13 = arith.constant dense<0.000000e+00> : vector<8x128xf32>
    %18 = tpu.matmul %16, %17, %cst_13 {dimension_numbers = #tpu.dot_dimension_numbers<[1], [0], [0], [1], [0, 0, 1, 1], [], []>} : vector<8x128xbf16>, vector<128x128xbf16>, vector<8x128xf32> -> vector<8x128xf32>
    %c2 = arith.constant 2 : index
    %c0_14 = arith.constant 0 : index
    %19 = vector.load %arg5[%c2, %c0_14] : memref<8x128xf32, #tpu.memory_space<vmem>>, vector<1x128xf32>
    %20 = vector.broadcast %19 : vector<1x128xf32> to vector<8x128xf32>
    %21 = arith.addf %18, %20 : vector<8x128xf32>
    %c3 = arith.constant 3 : index
    %c0_15 = arith.constant 0 : index
    %22 = vector.load %arg5[%c3, %c0_15] : memref<8x128xf32, #tpu.memory_space<vmem>>, vector<1x128xf32>
    %23 = math.tanh %21 : vector<8x128xf32>
    %24 = arith.subf %23, %21 : vector<8x128xf32>
    %25 = vector.broadcast %22 : vector<1x128xf32> to vector<8x128xf32>
    %26 = arith.mulf %25, %24 : vector<8x128xf32>
    %27 = arith.addf %21, %26 : vector<8x128xf32>
    %28 = arith.truncf %27 : vector<8x128xf32> to vector<8x128xbf16>
    %c0_16 = arith.constant 0 : index
    %c0_17 = arith.constant 0 : index
    %29 = vector.load %arg6[%c0_16, %c0_17] : memref<8x128xbf16, #tpu.memory_space<vmem>>, vector<8x128xbf16>
    tpu.vector_store %arg6[%c0_16, %c0_17], %28 {strides = array<i32>} : memref<8x128xbf16, #tpu.memory_space<vmem>>, vector<8x128xbf16>,
    return
  }
  func.func @transform_0(%arg0: i32) -> (i32, i32) {
    %c0_i32 = arith.constant 0 : i32
    %c0_i32_0 = arith.constant 0 : i32
    return %arg0, %c0_i32 : i32, i32
  }
  func.func @transform_1(%arg0: i32) -> (i32, i32) {
    %c0_i32 = arith.constant 0 : i32
    %c0_i32_0 = arith.constant 0 : i32
    %c0_i32_1 = arith.constant 0 : i32
    return %c0_i32, %c0_i32_0 : i32, i32
  }
  func.func @transform_2(%arg0: i32) -> (i32, i32) {
    %c0_i32 = arith.constant 0 : i32
    %c0_i32_0 = arith.constant 0 : i32
    %c0_i32_1 = arith.constant 0 : i32
    return %c0_i32, %c0_i32_0 : i32, i32
  }
  func.func @transform_3(%arg0: i32) -> (i32, i32) {
    %c0_i32 = arith.constant 0 : i32
    %c0_i32_0 = arith.constant 0 : i32
    %c0_i32_1 = arith.constant 0 : i32
    return %c0_i32, %c0_i32_0 : i32, i32
  }
  func.func @transform_4(%arg0: i32) -> (i32, i32) {
    %c0_i32 = arith.constant 0 : i32
    %c0_i32_0 = arith.constant 0 : i32
    %c0_i32_1 = arith.constant 0 : i32
    return %c0_i32, %c0_i32_0 : i32, i32
  }
  func.func @transform_5(%arg0: i32) -> (i32, i32) {
    %c0_i32 = arith.constant 0 : i32
    %c0_i32_0 = arith.constant 0 : i32
    return %arg0, %c0_i32 : i32, i32
  }
}

</mosaic_0001>

<llo_original>
// kernel: tpu_custom_call.1
$region0: #{tpu_custom_call.1}
  #allocation0 [shape = 'u32[]', space=smem, size = 0x4, offset = 0x4, fixed_abs, tag = 'smem constant byte address 0x4 - core index']
  #allocation1 [shape = 'u32[144,128]{1,0:T(1,128)}', space=vmem, size = 0x12000, scoped, tag = 'internal scratch']
  %s0 = inlined_call_operand.hbm [shape: bf16[8,16], index: 0, kind: input, shape index: {}]
  %s1 = inlined_call_operand.hbm [shape: bf16[16,128], index: 1, kind: input, shape index: {}]
  %s2 = inlined_call_operand.hbm [shape: bf16[128,128], index: 2, kind: input, shape index: {}]
  %s3 = inlined_call_operand.hbm [shape: bf16[128,128], index: 3, kind: input, shape index: {}]
  %s4 = inlined_call_operand.vmem [shape: f32[8,128], index: 4, kind: input, shape index: {}]
  %s5 = inlined_call_operand.hbm [shape: bf16[8,128], index: 5, kind: output, shape index: {}]
  %s6 = sld [smem:[#allocation0]]
  $region46: #{tpu_custom_call.1} parent=0
    _
  %s8 = ssub.s32 1, %s6
  %s9 = scalar_select 0, %s8, %s6
  $region1: #{tpu_custom_call.1} parent=0
    #allocation2 [shape = 'u8[2048]{0}', space=vmem, size = 0x800, scoped, tag = 'input window, operand 0, single buffered']
    #allocation3 [shape = 's32[1]{0}', space=sflag, size = 0x4, scoped, tag = 'scoped memory for tpu_custom_call.1']
    #allocation4 [shape = 's32[1]{0}', space=sflag, size = 0x4, scoped, tag = 'scoped memory for tpu_custom_call.1']
    #allocation5 [shape = 'u8[4096]{0}', space=vmem, size = 0x1000, scoped, tag = 'input window, operand 1, single buffered']
    #allocation6 [shape = 's32[1]{0}', space=sflag, size = 0x4, scoped, tag = 'scoped memory for tpu_custom_call.1']
    #allocation7 [shape = 'u8[32768]{0}', space=vmem, size = 0x8000, scoped, tag = 'input window, operand 2, single buffered']
    #allocation8 [shape = 'u8[32768]{0}', space=vmem, size = 0x8000, scoped, tag = 'input window, operand 3, single buffered']
    #allocation9 [shape = 's32[1]{0}', space=sflag, size = 0x4, scoped, tag = 'scoped memory for tpu_custom_call.1']
    #allocation10 [shape = 'u8[2048]{0}', space=vmem, size = 0x800, scoped, tag = 'output window, operand 0, single buffered']
    %10 = vsyncpa [#allocation3], 0
    %11 = vsyncpa [#allocation6], 0
    %12 = vsyncpa [#allocation9], 0
    %13 = vsyncpa [#allocation4], 0
    // Predicated region
    $region2: #{tpu_custom_call.1} parent=1 // pred_check
      _
    $region3: #{tpu_custom_call.1} parent=1 // pred_check_branch
      %15 = sbr.rel (0) target = $region5
    $region4: #{tpu_custom_call.1} parent=1 // pred_region
      %s17 = ssub.s32 64, 64
      %18 = vsyncadd [#allocation3], %s17
      %s20 = sshll.u32 [#allocation2], 4
      %s21 = int_to_ptr.vmem [resolvable:$true] %s20
      %23 = dma.hbm_to_vmem [thread:$0]  %s0, 64, %s21, [#allocation3]
    $region5: #{tpu_custom_call.1} parent=1 // pred_fallthru
      _
    // Predicated region
    $region6: #{tpu_custom_call.1} parent=1 // pred_check
      _
    $region7: #{tpu_custom_call.1} parent=1 // pred_check_branch
      %25 = sbr.rel (0) target = $region9
    $region8: #{tpu_custom_call.1} parent=1 // pred_region
      %s27 = ssub.s32 128, 128
      %28 = vsyncadd [#allocation6], %s27
      %s29 = sshll.u32 [#allocation5], 4
      %s30 = int_to_ptr.vmem [resolvable:$true] %s29
      %35 = dma.hbm_to_vmem [thread:$0]  %s1, 128, %s30, [#allocation6], 64, 64, 4
    $region9: #{tpu_custom_call.1} parent=1 // pred_fallthru
      _
    // Predicated region
    $region10: #{tpu_custom_call.1} parent=1 // pred_check
      _
    $region11: #{tpu_custom_call.1} parent=1 // pred_check_branch
      %37 = sbr.rel (0) target = $region13
    $region12: #{tpu_custom_call.1} parent=1 // pred_region
      %s39 = ssub.s32 1024, 1024
      %40 = vsyncadd [#allocation6], %s39
      %s41 = sshll.u32 [#allocation7], 4
      %s42 = int_to_ptr.vmem [resolvable:$true] %s41
      %47 = dma.hbm_to_vmem [thread:$0]  %s2, 1024, %s42, [#allocation6], 64, 64, 4
    $region13: #{tpu_custom_call.1} parent=1 // pred_fallthru
      _
    // Predicated region
    $region14: #{tpu_custom_call.1} parent=1 // pred_check
      _
    $region15: #{tpu_custom_call.1} parent=1 // pred_check_branch
      %49 = sbr.rel (0) target = $region17
    $region16: #{tpu_custom_call.1} parent=1 // pred_region
      %s51 = ssub.s32 1024, 1024
      %52 = vsyncadd [#allocation9], %s51
      %s53 = sshll.u32 [#allocation8], 4
      %s54 = int_to_ptr.vmem [resolvable:$true] %s53
      %59 = dma.hbm_to_vmem [thread:$0]  %s3, 1024, %s54, [#allocation9], 64, 64, 4
    $region17: #{tpu_custom_call.1} parent=1 // pred_fallthru
      _
    // Predicated region
    $region18: #{tpu_custom_call.1} parent=1 // pred_check
      _
    $region19: #{tpu_custom_call.1} parent=1 // pred_check_branch
      %61 = sbr.rel (0) target = $region21
    $region20: #{tpu_custom_call.1} parent=1 // pred_region
      _
    $region21: #{tpu_custom_call.1} parent=1 // pred_fallthru
      _
    // Predicated region
    $region22: #{tpu_custom_call.1} parent=1 // pred_check
      _
    $region23: #{tpu_custom_call.1} parent=1 // pred_check_branch
      %63 = sbr.rel (0) target = $region25
    $region24: #{tpu_custom_call.1} parent=1 // pred_region
      %64 = dma.done [#allocation3], 64
    $region25: #{tpu_custom_call.1} parent=1 // pred_fallthru
      _
    // Predicated region
    $region26: #{tpu_custom_call.1} parent=1 // pred_check
      _
    $region27: #{tpu_custom_call.1} parent=1 // pred_check_branch
      %66 = sbr.rel (0) target = $region29
    $region28: #{tpu_custom_call.1} parent=1 // pred_region
      %67 = dma.done [#allocation6], 128
    $region29: #{tpu_custom_call.1} parent=1 // pred_fallthru
      _
    // Predicated region
    $region30: #{tpu_custom_call.1} parent=1 // pred_check
      _
    $region31: #{tpu_custom_call.1} parent=1 // pred_check_branch
      %69 = sbr.rel (0) target = $region33
    $region32: #{tpu_custom_call.1} parent=1 // pred_region
      %70 = dma.done [#allocation6], 1024
    $region33: #{tpu_custom_call.1} parent=1 // pred_fallthru
      _
    // Predicated region
    $region34: #{tpu_custom_call.1} parent=1 // pred_check
      _
    $region35: #{tpu_custom_call.1} parent=1 // pred_check_branch
      %72 = sbr.rel (0) target = $region37
    $region36: #{tpu_custom_call.1} parent=1 // pred_region
      %73 = dma.done [#allocation9], 1024
    $region37: #{tpu_custom_call.1} parent=1 // pred_fallthru
      _
    %v75 = vld [vmem:[#allocation2] sm:$0xf]
    %v76 = vld [vmem:[#allocation5] sm:$0xf]
    %v77 = vld [vmem:[#allocation5 + $0x4] sm:$0xf]
    %v78 = vld [vmem:[%s4] sm:$0x1]
    %v79 = vlaneseq
    %v80 = vshrl.u32 %v79, 7
    %v81 = vsub.s32 0, %v80
    %v82 = vrot.slane %v78, %v81
    %v85 = vunpack.c.l.b16 %v76
    %v86 = vunpack.c.l.b16 %v77
    %v87 = vpack.c.b16 %v86, %v85
    %vm89 = vcmask 130048
    %v91 = vsel %vm89, %v75, 0
    %93 = vmatprep.subr.bf16.mxu0 0
    %94 = vmatpush1.bf16.msra.mxu0 %v87
    %95 = vmatprep.subr.bf16.mxu0 0
    %96 = vmatpush1.bf16.msra.mxu0 0
    %97 = vmatprep.subr.bf16.mxu0 0
    %98 = vmatpush1.bf16.msra.mxu0 0
    %99 = vmatprep.subr.bf16.mxu0 0
    %100 = vmatpush1.bf16.msra.mxu0 0
    %101 = vmatprep.subr.bf16.mxu0 0
    %102 = vmatpush1.bf16.msra.mxu0 0
    %103 = vmatprep.subr.bf16.mxu0 0
    %104 = vmatpush1.bf16.msra.mxu0 0
    %105 = vmatprep.subr.bf16.mxu0 0
    %106 = vmatpush1.bf16.msra.mxu0 0
    %107 = vmatprep.subr.bf16.mxu0 0
    %108 = vmatpush1.bf16.msra.mxu0 0
    %109 = vmatprep.subr.bf16.mxu0 0
    %110 = vmatpush1.bf16.msra.mxu0 0
    %111 = vmatprep.subr.bf16.mxu0 0
    %112 = vmatpush1.bf16.msra.mxu0 0
    %113 = vmatprep.subr.bf16.mxu0 0
    %114 = vmatpush1.bf16.msra.mxu0 0
    %115 = vmatprep.subr.bf16.mxu0 0
    %116 = vmatpush1.bf16.msra.mxu0 0
    %117 = vmatprep.subr.bf16.mxu0 0
    %118 = vmatpush1.bf16.msra.mxu0 0
    %119 = vmatprep.subr.bf16.mxu0 0
    %120 = vmatpush1.bf16.msra.mxu0 0
    %121 = vmatprep.subr.bf16.mxu0 0
    %122 = vmatpush1.bf16.msra.mxu0 0
    %123 = vmatprep.subr.bf16.mxu0 0
    %124 = vmatpush1.bf16.msra.mxu0 0
    %125 = vmatprep.mubr.bf16.mxu0 0
    %126 = vmatmul.mubr.bf16.gmra.mrb[0].mxu0 %v91
    %v127 = vpop.f32.mrb[0].mxu0
    %v128 = vadd.f32 %v82, %v127
    %v129 = vpop.f32.mrb[0].mxu0
    %v130 = vpop.f32.mrb[0].mxu0
    %v131 = vpop.f32.mrb[0].mxu0
    %132 = vdwg.mxu0
    %v133 = vmax.f32 %v128, 0.0
    %v134 = vpack.c.bf16 %v133, %v133
    %v135 = vld [vmem:[#allocation7] sm:$0xf]
    %v136 = vld [vmem:[#allocation7 + $0x4] sm:$0xf]
    %v137 = vld [vmem:[#allocation7 + $0x8] sm:$0xf]
    %v138 = vld [vmem:[#allocation7 + $0xc] sm:$0xf]
    %v139 = vld [vmem:[#allocation7 + $0x10] sm:$0xf]
    %v140 = vld [vmem:[#allocation7 + $0x14] sm:$0xf]
    %v141 = vld [vmem:[#allocation7 + $0x18] sm:$0xf]
    %v142 = vld [vmem:[#allocation7 + $0x1c] sm:$0xf]
    %v143 = vld [vmem:[#allocation7 + $0x20] sm:$0xf]
    %v144 = vld [vmem:[#allocation7 + $0x24] sm:$0xf]
    %v145 = vld [vmem:[#allocation7 + $0x28] sm:$0xf]
    %v146 = vld [vmem:[#allocation7 + $0x2c] sm:$0xf]
    %v147 = vld [vmem:[#allocation7 + $0x30] sm:$0xf]
    %v148 = vld [vmem:[#allocation7 + $0x34] sm:$0xf]
    %v149 = vld [vmem:[#allocation7 + $0x38] sm:$0xf]
    %v150 = vld [vmem:[#allocation7 + $0x3c] sm:$0xf]
    %v151 = vld [vmem:[%s4 + $0x1] sm:$0x1]
    %v152 = vlaneseq
    %v153 = vshrl.u32 %v152, 7
    %v154 = vsub.s32 0, %v153
    %v155 = vrot.slane %v151, %v154
    %v172 = vunpack.c.l.b16 %v135
    %v173 = vunpack.c.l.b16 %v136
    %v174 = vunpack.c.l.b16 %v137
    %v175 = vunpack.c.l.b16 %v138
    %v176 = vunpack.c.l.b16 %v139
    %v177 = vunpack.c.l.b16 %v140
    %v178 = vunpack.c.l.b16 %v141
    %v179 = vunpack.c.l.b16 %v142
    %v180 = vunpack.c.l.b16 %v143
    %v181 = vunpack.c.l.b16 %v144
    %v182 = vunpack.c.l.b16 %v145
    %v183 = vunpack.c.l.b16 %v146
    %v184 = vunpack.c.l.b16 %v147
    %v185 = vunpack.c.l.b16 %v148
    %v186 = vunpack.c.l.b16 %v149
    %v187 = vunpack.c.l.b16 %v150
    %v188 = vpack.c.b16 %v173, %v172
    %v189 = vpack.c.b16 %v175, %v174
    %v190 = vpack.c.b16 %v177, %v176
    %v191 = vpack.c.b16 %v179, %v178
    %v192 = vpack.c.b16 %v181, %v180
    %v193 = vpack.c.b16 %v183, %v182
    %v194 = vpack.c.b16 %v185, %v184
    %v195 = vpack.c.b16 %v187, %v186
    %204 = vmatprep.subr.bf16.mxu0 0
    %205 = vmatpush1.bf16.msra.mxu0 %v188
    %206 = vmatprep.subr.bf16.mxu0 0
    %207 = vmatpush1.bf16.msra.mxu0 %v189
    %208 = vmatprep.subr.bf16.mxu0 0
    %209 = vmatpush1.bf16.msra.mxu0 %v190
    %210 = vmatprep.subr.bf16.mxu0 0
    %211 = vmatpush1.bf16.msra.mxu0 %v191
    %212 = vmatprep.subr.bf16.mxu0 0
    %213 = vmatpush1.bf16.msra.mxu0 %v192
    %214 = vmatprep.subr.bf16.mxu0 0
    %215 = vmatpush1.bf16.msra.mxu0 %v193
    %216 = vmatprep.subr.bf16.mxu0 0
    %217 = vmatpush1.bf16.msra.mxu0 %v194
    %218 = vmatprep.subr.bf16.mxu0 0
    %219 = vmatpush1.bf16.msra.mxu0 %v195
    %220 = vmatprep.subr.bf16.mxu0 0
    %221 = vmatpush1.bf16.msra.mxu0 0
    %222 = vmatprep.subr.bf16.mxu0 0
    %223 = vmatpush1.bf16.msra.mxu0 0
    %224 = vmatprep.subr.bf16.mxu0 0
    %225 = vmatpush1.bf16.msra.mxu0 0
    %226 = vmatprep.subr.bf16.mxu0 0
    %227 = vmatpush1.bf16.msra.mxu0 0
    %228 = vmatprep.subr.bf16.mxu0 0
    %229 = vmatpush1.bf16.msra.mxu0 0
    %230 = vmatprep.subr.bf16.mxu0 0
    %231 = vmatpush1.bf16.msra.mxu0 0
    %232 = vmatprep.subr.bf16.mxu0 0
    %233 = vmatpush1.bf16.msra.mxu0 0
    %234 = vmatprep.subr.bf16.mxu0 0
    %235 = vmatpush1.bf16.msra.mxu0 0
    %236 = vmatprep.mubr.bf16.mxu0 0
    %237 = vmatmul.mubr.bf16.gmra.mrb[0].mxu0 %v134
    %v238 = vpop.f32.mrb[0].mxu0
    %v239 = vadd.f32 %v155, %v238
    %v240 = vpop.f32.mrb[0].mxu0
    %v241 = vpop.f32.mrb[0].mxu0
    %v242 = vpop.f32.mrb[0].mxu0
    %243 = vdwg.mxu0
    %v244 = vmax.f32 %v239, 0.0
    %v245 = vpack.c.bf16 %v244, %v244
    %v246 = vld [vmem:[#allocation8] sm:$0xf]
    %v247 = vld [vmem:[#allocation8 + $0x4] sm:$0xf]
    %v248 = vld [vmem:[#allocation8 + $0x8] sm:$0xf]
    %v249 = vld [vmem:[#allocation8 + $0xc] sm:$0xf]
    %v250 = vld [vmem:[#allocation8 + $0x10] sm:$0xf]
    %v251 = vld [vmem:[#allocation8 + $0x14] sm:$0xf]
    %v252 = vld [vmem:[#allocation8 + $0x18] sm:$0xf]
    %v253 = vld [vmem:[#allocation8 + $0x1c] sm:$0xf]
    %v254 = vld [vmem:[#allocation8 + $0x20] sm:$0xf]
    %v255 = vld [vmem:[#allocation8 + $0x24] sm:$0xf]
    %v256 = vld [vmem:[#allocation8 + $0x28] sm:$0xf]
    %v257 = vld [vmem:[#allocation8 + $0x2c] sm:$0xf]
    %v258 = vld [vmem:[#allocation8 + $0x30] sm:$0xf]
    %v259 = vld [vmem:[#allocation8 + $0x34] sm:$0xf]
    %v260 = vld [vmem:[#allocation8 + $0x38] sm:$0xf]
    %v261 = vld [vmem:[#allocation8 + $0x3c] sm:$0xf]
    %v262 = vld [vmem:[%s4 + $0x2] sm:$0x1]
    %v263 = vlaneseq
    %v264 = vshrl.u32 %v263, 7
    %v265 = vsub.s32 0, %v264
    %v266 = vrot.slane %v262, %v265
    %v283 = vunpack.c.l.b16 %v246
    %v284 = vunpack.c.l.b16 %v247
    %v285 = vunpack.c.l.b16 %v248
    %v286 = vunpack.c.l.b16 %v249
    %v287 = vunpack.c.l.b16 %v250
    %v288 = vunpack.c.l.b16 %v251
    %v289 = vunpack.c.l.b16 %v252
    %v290 = vunpack.c.l.b16 %v253
    %v291 = vunpack.c.l.b16 %v254
    %v292 = vunpack.c.l.b16 %v255
    %v293 = vunpack.c.l.b16 %v256
    %v294 = vunpack.c.l.b16 %v257
    %v295 = vunpack.c.l.b16 %v258
    %v296 = vunpack.c.l.b16 %v259
    %v297 = vunpack.c.l.b16 %v260
    %v298 = vunpack.c.l.b16 %v261
    %v299 = vpack.c.b16 %v284, %v283
    %v300 = vpack.c.b16 %v286, %v285
    %v301 = vpack.c.b16 %v288, %v287
    %v302 = vpack.c.b16 %v290, %v289
    %v303 = vpack.c.b16 %v292, %v291
    %v304 = vpack.c.b16 %v294, %v293
    %v305 = vpack.c.b16 %v296, %v295
    %v306 = vpack.c.b16 %v298, %v297
    %315 = vmatprep.subr.bf16.mxu0 0
    %316 = vmatpush1.bf16.msra.mxu0 %v299
    %317 = vmatprep.subr.bf16.mxu0 0
    %318 = vmatpush1.bf16.msra.mxu0 %v300
    %319 = vmatprep.subr.bf16.mxu0 0
    %320 = vmatpush1.bf16.msra.mxu0 %v301
    %321 = vmatprep.subr.bf16.mxu0 0
    %322 = vmatpush1.bf16.msra.mxu0 %v302
    %323 = vmatprep.subr.bf16.mxu0 0
    %324 = vmatpush1.bf16.msra.mxu0 %v303
    %325 = vmatprep.subr.bf16.mxu0 0
    %326 = vmatpush1.bf16.msra.mxu0 %v304
    %327 = vmatprep.subr.bf16.mxu0 0
    %328 = vmatpush1.bf16.msra.mxu0 %v305
    %329 = vmatprep.subr.bf16.mxu0 0
    %330 = vmatpush1.bf16.msra.mxu0 %v306
    %331 = vmatprep.subr.bf16.mxu0 0
    %332 = vmatpush1.bf16.msra.mxu0 0
    %333 = vmatprep.subr.bf16.mxu0 0
    %334 = vmatpush1.bf16.msra.mxu0 0
    %335 = vmatprep.subr.bf16.mxu0 0
    %336 = vmatpush1.bf16.msra.mxu0 0
    %337 = vmatprep.subr.bf16.mxu0 0
    %338 = vmatpush1.bf16.msra.mxu0 0
    %339 = vmatprep.subr.bf16.mxu0 0
    %340 = vmatpush1.bf16.msra.mxu0 0
    %341 = vmatprep.subr.bf16.mxu0 0
    %342 = vmatpush1.bf16.msra.mxu0 0
    %343 = vmatprep.subr.bf16.mxu0 0
    %344 = vmatpush1.bf16.msra.mxu0 0
    %345 = vmatprep.subr.bf16.mxu0 0
    %346 = vmatpush1.bf16.msra.mxu0 0
    %347 = vmatprep.mubr.bf16.mxu0 0
    %348 = vmatmul.mubr.bf16.gmra.mrb[0].mxu0 %v245
    %v349 = vpop.f32.mrb[0].mxu0
    %v350 = vadd.f32 %v266, %v349
    %v351 = vpop.f32.mrb[0].mxu0
    %v352 = vpop.f32.mrb[0].mxu0
    %v353 = vpop.f32.mrb[0].mxu0
    %354 = vdwg.mxu0
    %v355 = vld [vmem:[%s4 + $0x3] sm:$0x1]
    %v356 = vtanh.pop %v350
    %v357 = vsub.f32 %v356, %v350
    %v358 = vlaneseq
    %v359 = vshrl.u32 %v358, 7
    %v360 = vsub.s32 0, %v359
    %v361 = vrot.slane %v355, %v360
    %v362 = vmul.f32 %v361, %v357
    %v363 = vadd.f32 %v350, %v362
    %v364 = vpack.c.bf16 %v363, %v363
    %365 = vst [vmem:[#allocation10] sm:$0xf] %v364
    // Predicated region
    $region38: #{tpu_custom_call.1} parent=1 // pred_check
      _
    $region39: #{tpu_custom_call.1} parent=1 // pred_check_branch
      %367 = sbr.rel (0) target = $region41
    $region40: #{tpu_custom_call.1} parent=1 // pred_region
      %s369 = ssub.s32 64, 64
      %370 = vsyncadd [#allocation4], %s369
      %s372 = sshll.u32 [#allocation10], 4
      %s373 = int_to_ptr.vmem [resolvable:$true] %s372
      %375 = dma.vmem_to_hbm [thread:$0]  %s373, 64, %s5, [#allocation4]
    $region41: #{tpu_custom_call.1} parent=1 // pred_fallthru
      _
    // Predicated region
    $region42: #{tpu_custom_call.1} parent=1 // pred_check
      _
    $region43: #{tpu_custom_call.1} parent=1 // pred_check_branch
      %377 = sbr.rel (0) target = $region45
    $region44: #{tpu_custom_call.1} parent=1 // pred_region
      %378 = dma.done [#allocation4], 64
    $region45: #{tpu_custom_call.1} parent=1 // pred_fallthru
      _
    %379 = vsyncpa [#allocation3], 1
    %380 = vsyncpa [#allocation6], 1
    %381 = vsyncpa [#allocation9], 1
    %382 = vsyncpa [#allocation4], 1

</llo_original>
